<compile_context>
chip_gen: v6e
topology: v6e:2x2x1
jax: 0.10.0
libtpu: 0.0.40
codegen_flags: <defaults>
</compile_context>

<pallas_src>
import functools

import jax
import jax.numpy as jnp
from jax.experimental import pallas as pl
from jax.experimental.pallas import tpu as pltpu

# ---- config (mirrors the PyTorch config dict) --------------------------------
HIDDEN = 32           # config['hidden_size']
VOCAB = 30            # config['vocab_size']  (embedding table has VOCAB+1 rows)
MAX_LEN = 8           # config['max_length']
KSIZE = 3             # Conv1d kernel size
MODEL_TYPE = "gated_cnn"

VPAD = 32             # vocab rows padded 31 -> 32 (sublane aligned)
KPAD = 128            # conv contraction dim padded 3H=96 -> 128 (MXU aligned)
NPAD = 128            # conv output dim padded 2H=64 -> 128 (lane dense)


def _seq_pos(rows, seq, h):
    """Position of each flattened token row within its sentence, shape (rows, h)."""
    idx = jax.lax.broadcasted_iota(jnp.int32, (rows, h), 0)
    if seq & (seq - 1) == 0:                       # power of two -> cheap bitwise and
        return jnp.bitwise_and(idx, seq - 1)
    return jax.lax.rem(idx, seq)


# ---- fused kernel body --------------------------------------------------------
def _gated_conv_pool(ids_ref, emb_ref, w_ref, *, nsent, seq):
    """Embedding gather + gated Conv1d (k=3, same pad, no bias) + seq max-pool.

    ids_ref : VMEM (nsent*seq, 1) int32 token ids
    emb_ref : VMEM (VPAD, H)      embedding table (row 0 is the padding row)
    w_ref   : VMEM (KPAD, NPAD)   stacked/zero-padded weights:
                                  rows k*H:(k+1)*H = tap k (in, out),
                                  cols [:H] = conv, cols [H:2H] = gate, rest zero
    returns (nsent, H) f32 pooled sentence vectors
    """
    rows = nsent * seq
    h = HIDDEN
    vpad = emb_ref.shape[0]

    # --- embedding gather as a one-hot MXU matmul (no per-token dynamic slices) ---
    ids = ids_ref[...]                                               # (rows, 1) int32
    vocab_iota = jax.lax.broadcasted_iota(jnp.int32, (rows, vpad), 1)
    one_hot = (vocab_iota == ids).astype(jnp.float32)                # (rows, vpad)
    x = jnp.dot(one_hot, emb_ref[...],
                preferred_element_type=jnp.float32)                  # (rows, h)

    # --- k=0 / k=2 conv taps via XLU roll + sentence-boundary masks ("same" pad) ---
    pos = _seq_pos(rows, seq, h)                                     # (rows, h)
    x_prev = pltpu.roll(x, shift=1, axis=0)                          # row m <- x[m-1]
    x_next = pltpu.roll(x, shift=rows - 1, axis=0)                   # row m <- x[m+1]
    x_prev = jnp.where(pos == 0, 0.0, x_prev)                        # first token of sentence
    x_next = jnp.where(pos == seq - 1, 0.0, x_next)                  # last token of sentence

    # --- one 128-aligned MXU matmul produces [conv | gate] for the whole batch ---
    pad_cols = KPAD - KSIZE * h
    parts = [x_prev, x, x_next]
    if pad_cols:
        parts.append(jnp.zeros((rows, pad_cols), jnp.float32))
    window = jnp.concatenate(parts, axis=1)                          # (rows, KPAD)
    y = jnp.dot(window, w_ref[...],
                preferred_element_type=jnp.float32)                  # (rows, NPAD)
    gated = y[:, :h] * jax.nn.sigmoid(y[:, h:2 * h])                 # (rows, h)

    # --- max_pool1d over the sequence: layout-free reshape + sublane reduction ---
    return jnp.max(gated.reshape(nsent, seq, h), axis=1)             # (nsent, h)


def encode_kernel(ids_ref, emb_ref, w_ref, out_ref, *, nsent, seq):
    out_ref[...] = _gated_conv_pool(ids_ref, emb_ref, w_ref, nsent=nsent, seq=seq)


def triplet_kernel(ids_ref, emb_ref, w_ref, loss_ref, *, nsent, seq, margin):
    pooled = _gated_conv_pool(ids_ref, emb_ref, w_ref, nsent=nsent, seq=seq)  # (3B, H)
    bsz = nsent // 3

    def _normalize(v):   # torch.nn.functional.normalize(dim=-1), eps=1e-12
        nsq = jnp.sum(v * v, axis=-1, keepdims=True)
        return v * jax.lax.rsqrt(jnp.maximum(nsq, 1e-24))

    a = _normalize(pooled[0:bsz])
    p = _normalize(pooled[bsz:2 * bsz])
    n = _normalize(pooled[2 * bsz:3 * bsz])

    ap = 1.0 - jnp.sum(a * p, axis=-1, keepdims=True)                # (B, 1)
    an = 1.0 - jnp.sum(a * n, axis=-1, keepdims=True)                # (B, 1)
    diff = ap - an + margin

    mask = diff > 0.0
    cnt = jnp.sum(mask.astype(jnp.float32), keepdims=True)           # (1, 1)
    total = jnp.sum(jnp.where(mask, diff, 0.0), keepdims=True)       # (1, 1)
    # torch.mean(diff[diff > 0]) semantics: NaN when no positive entries (matches torch).
    loss_ref[...] = total / cnt


# ---- wrappers -----------------------------------------------------------------
def _run_fused(kernel_fn, ids2d, emb_pad, w_pad, out_shape):
    nsent, seq = ids2d.shape
    ids_col = ids2d.reshape(nsent * seq, 1).astype(jnp.int32)
    return pl.pallas_call(
        kernel_fn,
        out_shape=out_shape,
        grid=(1,),
        in_specs=[
            pl.BlockSpec(ids_col.shape, lambda i: (0, 0)),
            pl.BlockSpec(emb_pad.shape, lambda i: (0, 0)),
            pl.BlockSpec(w_pad.shape, lambda i: (0, 0)),
        ],
        out_specs=pl.BlockSpec(out_shape.shape, lambda i: (0, 0)),
        compiler_params=pltpu.CompilerParams(dimension_semantics=("arbitrary",)),
    )(ids_col, emb_pad, w_pad)


def sentence_encode(x_ids, emb_pad, w_pad):
    """x_ids: (B, L) int32 -> (B, H) float32 pooled sentence vectors (one kernel)."""
    bsz, seq = x_ids.shape
    kernel = functools.partial(encode_kernel, nsent=bsz, seq=seq)
    return _run_fused(kernel, x_ids, emb_pad, w_pad,
                      jax.ShapeDtypeStruct((bsz, HIDDEN), jnp.float32))


def triplet_loss_forward(ids_all, emb_pad, w_pad, margin):
    """ids_all: (3B, L) int32 (a|p|n stacked) -> scalar cosine-triplet loss (one kernel)."""
    nsent, seq = ids_all.shape
    kernel = functools.partial(triplet_kernel, nsent=nsent, seq=seq, margin=margin)
    loss = _run_fused(kernel, ids_all, emb_pad, w_pad,
                      jax.ShapeDtypeStruct((1, 1), jnp.float32))
    return loss[0, 0]


def siamese_forward(params, sentence1, sentence2=None, sentence3=None, Margin=None):
    emb_pad, w_pad = params
    if sentence2 is not None and sentence3 is not None:
        ids_all = jnp.concatenate([sentence1, sentence2, sentence3], axis=0)
        margin = 0.5 if Margin is None else float(Margin)
        return triplet_loss_forward(ids_all, emb_pad, w_pad, margin)
    return sentence_encode(sentence1, emb_pad, w_pad)


# ---- deterministic parameter init ----------------------------------------------
def init_params(key):
    k_emb, k_a, k_g = jax.random.split(key, 3)
    emb = 0.1 * jax.random.normal(k_emb, (VOCAB + 1, HIDDEN), jnp.float32)
    emb = emb.at[0].set(0.0)                                  # padding_idx=0
    emb_pad = jnp.zeros((VPAD, HIDDEN), jnp.float32).at[:VOCAB + 1, :].set(emb)

    # PyTorch Conv1d weight layout is (out, in, k); no bias.  Stack the taps into
    # one zero-padded (KPAD, NPAD) matrix: rows k*H:(k+1)*H hold tap k transposed
    # to (in, out); cols [:H] = conv weights, cols [H:2H] = gate weights.
    wa = 0.1 * jax.random.normal(k_a, (HIDDEN, HIDDEN, KSIZE), jnp.float32)
    wg = 0.1 * jax.random.normal(k_g, (HIDDEN, HIDDEN, KSIZE), jnp.float32)
    w_pad = jnp.zeros((KPAD, NPAD), jnp.float32)
    for k in range(KSIZE):
        w_pad = w_pad.at[k * HIDDEN:(k + 1) * HIDDEN, 0:HIDDEN].set(wa[:, :, k].T)
        w_pad = w_pad.at[k * HIDDEN:(k + 1) * HIDDEN, HIDDEN:2 * HIDDEN].set(wg[:, :, k].T)
    return emb_pad, w_pad


if __name__ == "__main__":
    key = jax.random.PRNGKey(0)
    k_params, k1, k2, k3 = jax.random.split(key, 4)
    params = init_params(k_params)

    B = 2
    sentence1 = jax.random.randint(k1, (B, MAX_LEN), 0, VOCAB + 1, dtype=jnp.int32)
    sentence2 = jax.random.randint(k2, (B, MAX_LEN), 0, VOCAB + 1, dtype=jnp.int32)
    sentence3 = jax.random.randint(k3, (B, MAX_LEN), 0, VOCAB + 1, dtype=jnp.int32)

    # single-sentence path (returns pooled vectors)
    vecs = siamese_forward(params, sentence1)
    jax.block_until_ready(vecs)
    assert vecs.shape == (B, HIDDEN)

    # triplet path (returns scalar loss)
    loss = siamese_forward(params, sentence1, sentence2, sentence3, Margin=None)
    jax.block_until_ready(loss)
    assert loss.shape == ()

    print("KERNEL_OK")
</pallas_src>

<mosaic_0001>
module attributes {stable_mosaic.version = 11 : i64} {
  func.func @encode_kernel(%arg0: i32, %arg1: memref<16x1xi32, #tpu.memory_space<vmem>>, %arg2: memref<32x32xf32, #tpu.memory_space<vmem>>, %arg3: memref<128x128xf32, #tpu.memory_space<vmem>>, %arg4: memref<2x32xf32, #tpu.memory_space<vmem>>) attributes {dimension_semantics = [#tpu.dimension_semantics<arbitrary>], iteration_bounds = array<i64: 1>, scalar_prefetch = 0 : i64, scratch_operands = 0 : i64, tpu.core_type = #tpu.core_type<tc>, window_params = [{pipeline_mode = #tpu.pipeline_mode<synchronous>, transform_indices = @transform_0, window_bounds = array<i64: 16, 1>}, {pipeline_mode = #tpu.pipeline_mode<synchronous>, transform_indices = @transform_1, window_bounds = array<i64: 32, 32>}, {pipeline_mode = #tpu.pipeline_mode<synchronous>, transform_indices = @transform_2, window_bounds = array<i64: 128, 128>}, {pipeline_mode = #tpu.pipeline_mode<synchronous>, transform_indices = @transform_3, window_bounds = array<i64: 2, 32>}]} {
    %c0 = arith.constant 0 : index
    %c0_0 = arith.constant 0 : index
    %0 = vector.load %arg1[%c0, %c0_0] : memref<16x1xi32, #tpu.memory_space<vmem>>, vector<16x1xi32>
    %1 = tpu.iota {dimensions = array<i32: 1>} : vector<16x32xi32>
    %2 = vector.broadcast %0 : vector<16x1xi32> to vector<16x32xi32>
    %3 = arith.cmpi eq, %1, %2 : vector<16x32xi32>
    %4 = arith.extui %3 : vector<16x32xi1> to vector<16x32xi32>
    %5 = arith.sitofp %4 : vector<16x32xi32> to vector<16x32xf32>
    %c0_1 = arith.constant 0 : index
    %c0_2 = arith.constant 0 : index
    %6 = vector.load %arg2[%c0_1, %c0_2] : memref<32x32xf32, #tpu.memory_space<vmem>>, vector<32x32xf32>
    %cst = arith.constant dense<0.000000e+00> : vector<16x32xf32>
    %7 = tpu.matmul %5, %6, %cst {dimension_numbers = #tpu.dot_dimension_numbers<[1], [0], [0], [1], [0, 0, 1, 1], [], []>} : vector<16x32xf32>, vector<32x32xf32>, vector<16x32xf32> -> vector<16x32xf32>
    %8 = tpu.iota {dimensions = array<i32: 0>} : vector<16x32xi32>
    %c7_i32 = arith.constant 7 : i32
    %9 = vector.broadcast %c7_i32 : i32 to vector<16x32xi32>
    %10 = arith.andi %8, %9 : vector<16x32xi32>
    %c1_i32 = arith.constant 1 : i32
    %11 = tpu.dynamic_rotate %7 by %c1_i32 dim 0 : vector<16x32xf32>, i32 -> vector<16x32xf32>
    %c15_i32 = arith.constant 15 : i32
    %12 = tpu.dynamic_rotate %7 by %c15_i32 dim 0 : vector<16x32xf32>, i32 -> vector<16x32xf32>
    %c0_i32 = arith.constant 0 : i32
    %13 = vector.broadcast %c0_i32 : i32 to vector<16x32xi32>
    %14 = arith.cmpi eq, %10, %13 : vector<16x32xi32>
    %cst_3 = arith.constant 0.000000e+00 : f32
    %15 = vector.broadcast %cst_3 : f32 to vector<16x32xf32>
    %16 = arith.select %14, %15, %11 : vector<16x32xi1>, vector<16x32xf32>
    %c7_i32_4 = arith.constant 7 : i32
    %17 = vector.broadcast %c7_i32_4 : i32 to vector<16x32xi32>
    %18 = arith.cmpi eq, %10, %17 : vector<16x32xi32>
    %cst_5 = arith.constant 0.000000e+00 : f32
    %19 = vector.broadcast %cst_5 : f32 to vector<16x32xf32>
    %20 = arith.select %18, %19, %12 : vector<16x32xi1>, vector<16x32xf32>
    %cst_6 = arith.constant 0.000000e+00 : f32
    %21 = vector.broadcast %cst_6 : f32 to vector<16x32xf32>
    %22 = tpu.concatenate %16, %7, %20, %21 in 1 : vector<16x32xf32>, vector<16x32xf32>, vector<16x32xf32>, vector<16x32xf32> -> vector<16x128xf32>
    %c0_7 = arith.constant 0 : index
    %c0_8 = arith.constant 0 : index
    %23 = vector.load %arg3[%c0_7, %c0_8] : memref<128x128xf32, #tpu.memory_space<vmem>>, vector<128x128xf32>
    %cst_9 = arith.constant dense<0.000000e+00> : vector<16x128xf32>
    %24 = tpu.matmul %22, %23, %cst_9 {dimension_numbers = #tpu.dot_dimension_numbers<[1], [0], [0], [1], [0, 0, 1, 1], [], []>} : vector<16x128xf32>, vector<128x128xf32>, vector<16x128xf32> -> vector<16x128xf32>
    %25 = vector.extract_strided_slice %24 {offsets = [0, 0], sizes = [16, 32], strides = [1, 1]} : vector<16x128xf32> to vector<16x32xf32>
    %26 = vector.extract_strided_slice %24 {offsets = [0, 32], sizes = [16, 32], strides = [1, 1]} : vector<16x128xf32> to vector<16x32xf32>
    %27 = arith.negf %26 : vector<16x32xf32>
    %28 = math.exp %27 : vector<16x32xf32>
    %cst_10 = arith.constant 1.000000e+00 : f32
    %29 = vector.broadcast %cst_10 : f32 to vector<16x32xf32>
    %30 = arith.addf %29, %28 : vector<16x32xf32>
    %31 = arith.divf %29, %30 : vector<16x32xf32>
    %32 = arith.mulf %25, %31 : vector<16x32xf32>
    %33 = vector.shape_cast %32 : vector<16x32xf32> to vector<2x8x32xf32>
    %cst_11 = arith.constant dense<0xFF800000> : vector<2x32xf32>
    %34 = vector.multi_reduction <maximumf>, %33, %cst_11 [1] : vector<2x8x32xf32> to vector<2x32xf32>
    %c0_12 = arith.constant 0 : index
    %c0_13 = arith.constant 0 : index
    %35 = vector.load %arg4[%c0_12, %c0_13] : memref<2x32xf32, #tpu.memory_space<vmem>>, vector<2x32xf32>
    tpu.vector_store %arg4[%c0_12, %c0_13], %34 {strides = array<i32>} : memref<2x32xf32, #tpu.memory_space<vmem>>, vector<2x32xf32>,
    return
  }
  func.func @transform_0(%arg0: i32) -> (i32, i32) {
    %c0_i32 = arith.constant 0 : i32
    %c0_i32_0 = arith.constant 0 : i32
    %c0_i32_1 = arith.constant 0 : i32
    return %c0_i32, %c0_i32_0 : i32, i32
  }
  func.func @transform_1(%arg0: i32) -> (i32, i32) {
    %c0_i32 = arith.constant 0 : i32
    %c0_i32_0 = arith.constant 0 : i32
    %c0_i32_1 = arith.constant 0 : i32
    return %c0_i32, %c0_i32_0 : i32, i32
  }
  func.func @transform_2(%arg0: i32) -> (i32, i32) {
    %c0_i32 = arith.constant 0 : i32
    %c0_i32_0 = arith.constant 0 : i32
    %c0_i32_1 = arith.constant 0 : i32
    return %c0_i32, %c0_i32_0 : i32, i32
  }
  func.func @transform_3(%arg0: i32) -> (i32, i32) {
    %c0_i32 = arith.constant 0 : i32
    %c0_i32_0 = arith.constant 0 : i32
    %c0_i32_1 = arith.constant 0 : i32
    return %c0_i32, %c0_i32_0 : i32, i32
  }
}

</mosaic_0001>

<llo_original>
// kernel: tpu_custom_call.1
$region0: #{tpu_custom_call.1}
  #allocation0 [shape = 'u32[]', space=smem, size = 0x4, offset = 0x4, fixed_abs, tag = 'smem constant byte address 0x4 - core index']
  #allocation1 [shape = 'u32[144,128]{1,0:T(1,128)}', space=vmem, size = 0x12000, scoped, tag = 'internal scratch']
  %s0 = inlined_call_operand.vmem [shape: s32[16,1], index: 0, kind: input, shape index: {}]
  %s1 = inlined_call_operand.hbm [shape: f32[32,32], index: 1, kind: input, shape index: {}]
  %s2 = inlined_call_operand.hbm [shape: f32[128,128], index: 2, kind: input, shape index: {}]
  %s3 = inlined_call_operand.hbm [shape: f32[2,32], index: 3, kind: output, shape index: {}]
  %s4 = sld [smem:[#allocation0]]
  $region30: #{tpu_custom_call.1} parent=0
    _
  %s6 = ssub.s32 1, %s4
  %s7 = scalar_select 0, %s6, %s4
  $region1: #{tpu_custom_call.1} parent=0
    #allocation2 [shape = 'u8[16384]{0}', space=vmem, size = 0x4000, scoped, tag = 'input window, operand 1, single buffered']
    #allocation3 [shape = 's32[1]{0}', space=sflag, size = 0x4, scoped, tag = 'scoped memory for tpu_custom_call.1']
    #allocation4 [shape = 's32[1]{0}', space=sflag, size = 0x4, scoped, tag = 'scoped memory for tpu_custom_call.1']
    #allocation5 [shape = 'u8[65536]{0}', space=vmem, size = 0x10000, scoped, tag = 'input window, operand 2, single buffered']
    #allocation6 [shape = 's32[1]{0}', space=sflag, size = 0x4, scoped, tag = 'scoped memory for tpu_custom_call.1']
    #allocation7 [shape = 'u8[1024]{0}', space=vmem, size = 0x400, scoped, tag = 'output window, operand 0, single buffered']
    %8 = vsyncpa [#allocation3], 0
    %9 = vsyncpa [#allocation6], 0
    %10 = vsyncpa [#allocation4], 0
    // Predicated region
    $region2: #{tpu_custom_call.1} parent=1 // pred_check
      _
    $region3: #{tpu_custom_call.1} parent=1 // pred_check_branch
      %12 = sbr.rel (0) target = $region5
    $region4: #{tpu_custom_call.1} parent=1 // pred_region
      _
    $region5: #{tpu_custom_call.1} parent=1 // pred_fallthru
      _
    // Predicated region
    $region6: #{tpu_custom_call.1} parent=1 // pred_check
      _
    $region7: #{tpu_custom_call.1} parent=1 // pred_check_branch
      %14 = sbr.rel (0) target = $region9
    $region8: #{tpu_custom_call.1} parent=1 // pred_region
      %s16 = ssub.s32 512, 512
      %17 = vsyncadd [#allocation3], %s16
      %s18 = sshll.u32 [#allocation2], 4
      %s19 = int_to_ptr.vmem [resolvable:$true] %s18
      %24 = dma.hbm_to_vmem [thread:$0]  %s1, 512, %s19, [#allocation3], 128, 128, 8
    $region9: #{tpu_custom_call.1} parent=1 // pred_fallthru
      _
    // Predicated region
    $region10: #{tpu_custom_call.1} parent=1 // pred_check
      _
    $region11: #{tpu_custom_call.1} parent=1 // pred_check_branch
      %26 = sbr.rel (0) target = $region13
    $region12: #{tpu_custom_call.1} parent=1 // pred_region
      %s28 = ssub.s32 2048, 2048
      %29 = vsyncadd [#allocation6], %s28
      %s30 = sshll.u32 [#allocation5], 4
      %s31 = int_to_ptr.vmem [resolvable:$true] %s30
      %36 = dma.hbm_to_vmem [thread:$0]  %s2, 2048, %s31, [#allocation6], 128, 128, 8
    $region13: #{tpu_custom_call.1} parent=1 // pred_fallthru
      _
    // Predicated region
    $region14: #{tpu_custom_call.1} parent=1 // pred_check
      _
    $region15: #{tpu_custom_call.1} parent=1 // pred_check_branch
      %38 = sbr.rel (0) target = $region17
    $region16: #{tpu_custom_call.1} parent=1 // pred_region
      %39 = dma.done [#allocation3], 512
    $region17: #{tpu_custom_call.1} parent=1 // pred_fallthru
      _
    // Predicated region
    $region18: #{tpu_custom_call.1} parent=1 // pred_check
      _
    $region19: #{tpu_custom_call.1} parent=1 // pred_check_branch
      %41 = sbr.rel (0) target = $region21
    $region20: #{tpu_custom_call.1} parent=1 // pred_region
      %42 = dma.done [#allocation6], 2048
    $region21: #{tpu_custom_call.1} parent=1 // pred_fallthru
      _
    %v43 = vld [vmem:[%s0] sm:$0xff]
    %v44 = vld [vmem:[%s0 + $0x8] sm:$0xff]
    %v45 = vlaneseq
    %v46 = vand.u32 %v45, 127
    %47 = vset.pattern.permute.xlu0 0
    %48 = vperm.xlu0 %47, %v43
    %v49 = vpop.permute.xlu0 %48
    %50 = vset.pattern.permute.xlu0 0
    %51 = vperm.xlu0 %50, %v44
    %v52 = vpop.permute.xlu0 %51
    %vm53 = vcmp.eq.s32.totalorder %v46, %v49
    %vm54 = vcmp.eq.s32.totalorder %v46, %v52
    %v55 = vsel %vm53, 1, 0
    %v56 = vsel %vm54, 1, 0
    %v57 = vcvt.s32.f32 %v55
    %v58 = vcvt.s32.f32 %v56
    %v59 = vld [vmem:[#allocation2] sm:$0xff]
    %v60 = vld [vmem:[#allocation2 + $0x8] sm:$0xff]
    %v61 = vld [vmem:[#allocation2 + $0x10] sm:$0xff]
    %v62 = vld [vmem:[#allocation2 + $0x18] sm:$0xff]
    %vm63 = vcmask 261120
    %v65 = vsel %vm63, %v57, 0
    %v68 = vsel %vm63, %v58, 0
    %70 = vmatprep.subr.mxu0 0.0
    %71 = vmatpush1.msra.mxu0 0.0
    %72 = vmatprep.subr.mxu0 0.0
    %73 = vmatpush1.msra.mxu0 0.0
    %74 = vmatprep.subr.mxu0 0.0
    %75 = vmatpush1.msra.mxu0 0.0
    %76 = vmatprep.subr.mxu0 0.0
    %77 = vmatpush1.msra.mxu0 0.0
    %78 = vmatprep.subr.mxu0 0.0
    %79 = vmatpush1.msra.mxu0 0.0
    %80 = vmatprep.subr.mxu0 0.0
    %81 = vmatpush1.msra.mxu0 0.0
    %82 = vmatprep.subr.mxu0 0.0
    %83 = vmatpush1.msra.mxu0 0.0
    %84 = vmatprep.subr.mxu0 0.0
    %85 = vmatpush1.msra.mxu0 0.0
    %86 = vmatprep.subr.mxu0 0.0
    %87 = vmatpush1.msra.mxu0 0.0
    %88 = vmatprep.subr.mxu0 0.0
    %89 = vmatpush1.msra.mxu0 0.0
    %90 = vmatprep.subr.mxu0 0.0
    %91 = vmatpush1.msra.mxu0 0.0
    %92 = vmatprep.subr.mxu0 0.0
    %93 = vmatpush1.msra.mxu0 0.0
    %94 = vmatprep.subr.mxu0 0.0
    %95 = vmatpush1.msra.mxu0 %v62
    %96 = vmatprep.subr.mxu0 0.0
    %97 = vmatpush1.msra.mxu0 %v61
    %98 = vmatprep.subr.mxu0 0.0
    %99 = vmatpush1.msra.mxu0 %v60
    %100 = vmatprep.subr.mxu0 0.0
    %101 = vmatpush1.msra.mxu0 %v59
    %102 = vmatprep.subr.mxu0 0.0
    %103 = vmatpush2.msra.mxu0 0.0
    %104 = vmatprep.subr.mxu0 0.0
    %105 = vmatpush2.msra.mxu0 0.0
    %106 = vmatprep.subr.mxu0 0.0
    %107 = vmatpush2.msra.mxu0 0.0
    %108 = vmatprep.subr.mxu0 0.0
    %109 = vmatpush2.msra.mxu0 0.0
    %110 = vmatprep.subr.mxu0 0.0
    %111 = vmatpush2.msra.mxu0 0.0
    %112 = vmatprep.subr.mxu0 0.0
    %113 = vmatpush2.msra.mxu0 0.0
    %114 = vmatprep.subr.mxu0 0.0
    %115 = vmatpush2.msra.mxu0 0.0
    %116 = vmatprep.subr.mxu0 0.0
    %117 = vmatpush2.msra.mxu0 0.0
    %118 = vmatprep.subr.mxu0 0.0
    %119 = vmatpush2.msra.mxu0 0.0
    %120 = vmatprep.subr.mxu0 0.0
    %121 = vmatpush2.msra.mxu0 0.0
    %122 = vmatprep.subr.mxu0 0.0
    %123 = vmatpush2.msra.mxu0 0.0
    %124 = vmatprep.subr.mxu0 0.0
    %125 = vmatpush2.msra.mxu0 0.0
    %126 = vmatprep.subr.mxu0 0.0
    %127 = vmatpush2.msra.mxu0 0.0
    %128 = vmatprep.subr.mxu0 0.0
    %129 = vmatpush2.msra.mxu0 0.0
    %130 = vmatprep.subr.mxu0 0.0
    %131 = vmatpush2.msra.mxu0 0.0
    %132 = vmatprep.subr.mxu0 0.0
    %133 = vmatpush2.msra.mxu0 0.0
    %134 = vmatprep.mubr.f32.mxu0 0.0
    %135 = vmatmul.mubr.f32.gmra.mxu0 %v65
    %v136 = vpop.f32.mrf.mxu0
    %v137 = vadd.f32 0.0, %v136
    %v138 = vpop.f32.mrf.mxu0
    %139 = vmatprep.mubr.f32.mxu0 0.0
    %140 = vmatmul.mubr.f32.gmra.mxu0 %v68
    %v141 = vpop.f32.mrf.mxu0
    %v142 = vadd.f32 0.0, %v141
    %v143 = vpop.f32.mrf.mxu0
    %144 = vdwg.mxu0
    %v145 = vlaneseq
    %v146 = vshrl.u32 %v145, 7
    %v147 = vadd.s32 %v146, 8
    %v148 = vand.u32 %v146, 7
    %v149 = vand.u32 %v147, 7
    %v150 = vrot.slane %v137, 7
    %v151 = vrot.slane %v142, 7
    %vm152 = vcmp.lt.s32.totalorder %v146, 1
    %v153 = vsel %vm152, %v150, %v151
    %v154 = vsel %vm152, %v151, %v150
    %v155 = vrot.slane %v137, 1
    %v156 = vrot.slane %v142, 1
    %vm157 = vcmp.lt.s32.totalorder %v146, 7
    %v158 = vsel %vm157, %v155, %v156
    %v159 = vsel %vm157, %v156, %v155
    %vm160 = vcmp.eq.s32.totalorder %v148, 0
    %vm161 = vcmp.eq.s32.totalorder %v149, 0
    %v162 = vsel %vm160, 0.0, %v154
    %v163 = vsel %vm161, 0.0, %v153
    %vm164 = vcmp.eq.s32.totalorder %v148, 7
    %vm165 = vcmp.eq.s32.totalorder %v149, 7
    %v166 = vsel %vm164, 0.0, %v158
    %v167 = vsel %vm165, 0.0, %v159
    %170 = vrot.lane.b32.xlu0 %v137, 32
    %v171 = vpop.permute.xlu0 %170
    %172 = vrot.lane.b32.xlu0 %v142, 32
    %v173 = vpop.permute.xlu0 %172
    %178 = vrot.lane.b32.xlu0 %v166, 64
    %v179 = vpop.permute.xlu0 %178
    %180 = vrot.lane.b32.xlu0 %v167, 64
    %v181 = vpop.permute.xlu0 %180
    %v184 = vsel %vm63, %v162, %v171
    %v185 = vsel %vm63, %v163, %v173
    %vm186 = vcmask 523264
    %v187 = vsel %vm186, %v184, %v179
    %v188 = vsel %vm186, %v185, %v181
    %vm189 = vcmask 785408
    %v190 = vsel %vm189, %v187, 0.0
    %v191 = vsel %vm189, %v188, 0.0
    %v192 = vld [vmem:[#allocation5] sm:$0xff]
    %v193 = vld [vmem:[#allocation5 + $0x8] sm:$0xff]
    %v194 = vld [vmem:[#allocation5 + $0x10] sm:$0xff]
    %v195 = vld [vmem:[#allocation5 + $0x18] sm:$0xff]
    %v196 = vld [vmem:[#allocation5 + $0x20] sm:$0xff]
    %v197 = vld [vmem:[#allocation5 + $0x28] sm:$0xff]
    %v198 = vld [vmem:[#allocation5 + $0x30] sm:$0xff]
    %v199 = vld [vmem:[#allocation5 + $0x38] sm:$0xff]
    %v200 = vld [vmem:[#allocation5 + $0x40] sm:$0xff]
    %v201 = vld [vmem:[#allocation5 + $0x48] sm:$0xff]
    %v202 = vld [vmem:[#allocation5 + $0x50] sm:$0xff]
    %v203 = vld [vmem:[#allocation5 + $0x58] sm:$0xff]
    %v204 = vld [vmem:[#allocation5 + $0x60] sm:$0xff]
    %v205 = vld [vmem:[#allocation5 + $0x68] sm:$0xff]
    %v206 = vld [vmem:[#allocation5 + $0x70] sm:$0xff]
    %v207 = vld [vmem:[#allocation5 + $0x78] sm:$0xff]
    %208 = vmatprep.subr.mxu0 0.0
    %209 = vmatpush1.msra.mxu0 %v207
    %210 = vmatprep.subr.mxu0 0.0
    %211 = vmatpush1.msra.mxu0 %v206
    %212 = vmatprep.subr.mxu0 0.0
    %213 = vmatpush1.msra.mxu0 %v205
    %214 = vmatprep.subr.mxu0 0.0
    %215 = vmatpush1.msra.mxu0 %v204
    %216 = vmatprep.subr.mxu0 0.0
    %217 = vmatpush1.msra.mxu0 %v203
    %218 = vmatprep.subr.mxu0 0.0
    %219 = vmatpush1.msra.mxu0 %v202
    %220 = vmatprep.subr.mxu0 0.0
    %221 = vmatpush1.msra.mxu0 %v201
    %222 = vmatprep.subr.mxu0 0.0
    %223 = vmatpush1.msra.mxu0 %v200
    %224 = vmatprep.subr.mxu0 0.0
    %225 = vmatpush1.msra.mxu0 %v199
    %226 = vmatprep.subr.mxu0 0.0
    %227 = vmatpush1.msra.mxu0 %v198
    %228 = vmatprep.subr.mxu0 0.0
    %229 = vmatpush1.msra.mxu0 %v197
    %230 = vmatprep.subr.mxu0 0.0
    %231 = vmatpush1.msra.mxu0 %v196
    %232 = vmatprep.subr.mxu0 0.0
    %233 = vmatpush1.msra.mxu0 %v195
    %234 = vmatprep.subr.mxu0 0.0
    %235 = vmatpush1.msra.mxu0 %v194
    %236 = vmatprep.subr.mxu0 0.0
    %237 = vmatpush1.msra.mxu0 %v193
    %238 = vmatprep.subr.mxu0 0.0
    %239 = vmatpush1.msra.mxu0 %v192
    %240 = vmatprep.subr.mxu0 0.0
    %241 = vmatpush2.msra.mxu0 0.0
    %242 = vmatprep.subr.mxu0 0.0
    %243 = vmatpush2.msra.mxu0 0.0
    %244 = vmatprep.subr.mxu0 0.0
    %245 = vmatpush2.msra.mxu0 0.0
    %246 = vmatprep.subr.mxu0 0.0
    %247 = vmatpush2.msra.mxu0 0.0
    %248 = vmatprep.subr.mxu0 0.0
    %249 = vmatpush2.msra.mxu0 0.0
    %250 = vmatprep.subr.mxu0 0.0
    %251 = vmatpush2.msra.mxu0 0.0
    %252 = vmatprep.subr.mxu0 0.0
    %253 = vmatpush2.msra.mxu0 0.0
    %254 = vmatprep.subr.mxu0 0.0
    %255 = vmatpush2.msra.mxu0 0.0
    %256 = vmatprep.subr.mxu0 0.0
    %257 = vmatpush2.msra.mxu0 0.0
    %258 = vmatprep.subr.mxu0 0.0
    %259 = vmatpush2.msra.mxu0 0.0
    %260 = vmatprep.subr.mxu0 0.0
    %261 = vmatpush2.msra.mxu0 0.0
    %262 = vmatprep.subr.mxu0 0.0
    %263 = vmatpush2.msra.mxu0 0.0
    %264 = vmatprep.subr.mxu0 0.0
    %265 = vmatpush2.msra.mxu0 0.0
    %266 = vmatprep.subr.mxu0 0.0
    %267 = vmatpush2.msra.mxu0 0.0
    %268 = vmatprep.subr.mxu0 0.0
    %269 = vmatpush2.msra.mxu0 0.0
    %270 = vmatprep.subr.mxu0 0.0
    %271 = vmatpush2.msra.mxu0 0.0
    %272 = vmatprep.mubr.f32.mxu0 0.0
    %273 = vmatmul.mubr.f32.gmra.mxu0 %v190
    %v274 = vpop.f32.mrf.mxu0
    %v275 = vadd.f32 0.0, %v274
    %v276 = vpop.f32.mrf.mxu0
    %277 = vmatprep.mubr.f32.mxu0 0.0
    %278 = vmatmul.mubr.f32.gmra.mxu0 %v191
    %v279 = vpop.f32.mrf.mxu0
    %v280 = vadd.f32 0.0, %v279
    %v281 = vpop.f32.mrf.mxu0
    %282 = vdwg.mxu0
    %v283 = vxor.u32 %v275, 2147483648
    %v284 = vxor.u32 %v280, 2147483648
    %v285 = vmul.f32 %v283, 1.442695
    %v286 = vpow.pop %v285
    %v287 = vmul.f32 %v284, 1.442695
    %v288 = vpow.pop %v287
    %v289 = vadd.f32 %v286, 1.0
    %v290 = vadd.f32 %v288, 1.0
    %v291 = vrcp.pop %v289
    %v292 = vmul.f32 1.0, %v291
    %v293 = vrcp.pop %v290
    %v294 = vmul.f32 1.0, %v293
    %297 = vrot.lane.b32.xlu0 %v292, 96
    %v298 = vpop.permute.xlu0 %297
    %299 = vrot.lane.b32.xlu0 %v294, 96
    %v300 = vpop.permute.xlu0 %299
    %v303 = vmul.f32 %v275, %v298
    %v304 = vmul.f32 %v280, %v300
    %v305 = vsel %vm63, %v303, -inf
    %v306 = vrot.slane %v305, 4
    %v307 = vmax.f32 %v305, %v306
    %v308 = vrot.slane %v307, 2
    %v309 = vmax.f32 %v307, %v308
    %v310 = vrot.slane %v309, 1
    %v311 = vmax.f32 %v309, %v310
    %v312 = vsel %vm63, %v304, -inf
    %v313 = vrot.slane %v312, 4
    %v314 = vmax.f32 %v312, %v313
    %v315 = vrot.slane %v314, 2
    %v316 = vmax.f32 %v314, %v315
    %v317 = vrot.slane %v316, 1
    %v318 = vmax.f32 %v316, %v317
    %vm321 = vcmask 1041409
    %v322 = vsel %vm321, %v318, %v311
    %vm324 = vcmask 254976
    %325 = vst.msk [vmem:[#allocation7] sm:$0x3] %vm324, %v322
    // Predicated region
    $region22: #{tpu_custom_call.1} parent=1 // pred_check
      _
    $region23: #{tpu_custom_call.1} parent=1 // pred_check_branch
      %327 = sbr.rel (0) target = $region25
    $region24: #{tpu_custom_call.1} parent=1 // pred_region
      %s329 = ssub.s32 32, 32
      %330 = vsyncadd [#allocation4], %s329
      %s332 = sshll.u32 [#allocation7], 4
      %s333 = int_to_ptr.vmem [resolvable:$true] %s332
      %335 = dma.vmem_to_hbm [thread:$0]  %s333, 32, %s3, [#allocation4]
    $region25: #{tpu_custom_call.1} parent=1 // pred_fallthru
      _
    // Predicated region
    $region26: #{tpu_custom_call.1} parent=1 // pred_check
      _
    $region27: #{tpu_custom_call.1} parent=1 // pred_check_branch
      %337 = sbr.rel (0) target = $region29
    $region28: #{tpu_custom_call.1} parent=1 // pred_region
      %338 = dma.done [#allocation4], 32
    $region29: #{tpu_custom_call.1} parent=1 // pred_fallthru
      _
    %339 = vsyncpa [#allocation3], 1
    %340 = vsyncpa [#allocation6], 1
    %341 = vsyncpa [#allocation4], 1

</llo_original>
